<compile_context>
chip_gen: v6e
topology: v6e:2x2x1
jax: 0.10.0
libtpu: 0.0.40
codegen_flags: <defaults>
</compile_context>

<pallas_src>
import jax
import jax.numpy as jnp
from jax.experimental import pallas as pl
from jax.experimental.pallas import tpu as pltpu


# ----------------------------------------------------------------------------
# Kernels
# ----------------------------------------------------------------------------
def _identity_kernel(x_ref, o_ref):
    # Forward of GradientReversal: plain pass-through of the tile.
    o_ref[...] = x_ref[...]


def _neg_scale_kernel(alpha_ref, g_ref, o_ref):
    # Backward of GradientReversal: grad_in = -alpha * grad_out.
    o_ref[...] = (-alpha_ref[0]) * g_ref[...]


# ----------------------------------------------------------------------------
# Tiling helpers
# ----------------------------------------------------------------------------
def _pick_tile_rows(rows, cols, itemsize, budget_bytes=4 * 1024 * 1024):
    """Largest row-tile whose block stays under ~4 MiB.

    With double-buffered input + output that is <= ~16 MiB of VMEM, safely
    inside the 32 MiB scoped default on v7x (and trivially fine on v5e/v6e),
    while being large enough to amortize the ~0.35 us/step grid overhead.
    """
    tb = max(8, budget_bytes // max(1, cols * itemsize))
    tb = min(tb, rows)
    if tb != rows:
        # Second-to-last block dim must be a multiple of 8 unless full extent.
        tb = max(8, (tb // 8) * 8)
    return tb


def _compiler_params():
    return pltpu.CompilerParams(
        dimension_semantics=("parallel",),       # megacore sharding on v7x
        vmem_limit_bytes=32 * 1024 * 1024,
    )


def _as_2d(x):
    """Flatten to [rows, last_dim]; keep last dim on the lane axis."""
    return x.reshape(-1, x.shape[-1])


# ----------------------------------------------------------------------------
# Pallas-backed forward / backward
# ----------------------------------------------------------------------------
def _identity_copy(x):
    orig_shape = x.shape
    x2 = _as_2d(x)
    rows, cols = x2.shape
    tb = _pick_tile_rows(rows, cols, x2.dtype.itemsize)
    nbytes = x2.size * x2.dtype.itemsize

    out = pl.pallas_call(
        _identity_kernel,
        out_shape=jax.ShapeDtypeStruct((rows, cols), x2.dtype),
        grid=(pl.cdiv(rows, tb),),
        in_specs=[pl.BlockSpec((tb, cols), lambda i: (i, 0))],
        out_specs=pl.BlockSpec((tb, cols), lambda i: (i, 0)),
        compiler_params=_compiler_params(),
        cost_estimate=pl.CostEstimate(
            flops=0, transcendentals=0, bytes_accessed=2 * nbytes),
    )(x2)
    return out.reshape(orig_shape)


def _reverse_grad(g, alpha):
    orig_shape = g.shape
    g2 = _as_2d(g)
    rows, cols = g2.shape
    tb = _pick_tile_rows(rows, cols, g2.dtype.itemsize)
    nbytes = g2.size * g2.dtype.itemsize
    alpha_arr = jnp.asarray(alpha, jnp.float32).reshape(1)

    out = pl.pallas_call(
        _neg_scale_kernel,
        out_shape=jax.ShapeDtypeStruct((rows, cols), g2.dtype),
        grid=(pl.cdiv(rows, tb),),
        in_specs=[
            pl.BlockSpec(memory_space=pltpu.MemorySpace.SMEM),   # alpha scalar
            pl.BlockSpec((tb, cols), lambda i: (i, 0)),
        ],
        out_specs=pl.BlockSpec((tb, cols), lambda i: (i, 0)),
        compiler_params=_compiler_params(),
        cost_estimate=pl.CostEstimate(
            flops=g2.size, transcendentals=0, bytes_accessed=2 * nbytes),
    )(alpha_arr, g2)
    return out.reshape(orig_shape)


# ----------------------------------------------------------------------------
# Public op: matches GradientReversal.forward / .backward semantics
# ----------------------------------------------------------------------------
@jax.custom_vjp
def gradient_reversal(x, alpha):
    return _identity_copy(x)


def _grev_fwd(x, alpha):
    return _identity_copy(x), alpha


def _grev_bwd(alpha, g):
    # No gradient for alpha (PyTorch returns None for it).
    return (_reverse_grad(g, alpha), jnp.zeros_like(jnp.asarray(alpha)))


gradient_reversal.defvjp(_grev_fwd, _grev_bwd)


# ----------------------------------------------------------------------------
# Demo / self-test
# ----------------------------------------------------------------------------
if __name__ == "__main__":
    # Small shapes: batch=8, features=256 (last dim multiple of 128 -> lane-dense).
    B, D = 8, 256
    key = jax.random.PRNGKey(0)
    x = jax.random.normal(key, (B, D), jnp.float32)
    alpha = jnp.float32(0.7)

    # Forward: must be an exact identity.
    y = gradient_reversal(x, alpha)
    y = jax.block_until_ready(y)
    assert y.shape == x.shape
    assert jnp.array_equal(y, x)

    # Backward: dL/dx = -alpha * dL/dy  (gradient reversal).
    g = jax.grad(lambda t: jnp.sum(gradient_reversal(t, alpha)))(x)
    g = jax.block_until_ready(g)
    assert jnp.allclose(g, -alpha * jnp.ones_like(x), atol=1e-6, rtol=1e-6)

    print("KERNEL_OK")
</pallas_src>

<mosaic_0001>
module attributes {stable_mosaic.version = 11 : i64} {
  func.func @_identity_kernel(%arg0: i32, %arg1: memref<8x256xf32, #tpu.memory_space<vmem>>, %arg2: memref<8x256xf32, #tpu.memory_space<vmem>>) attributes {dimension_semantics = [#tpu.dimension_semantics<parallel>], iteration_bounds = array<i64: 1>, scalar_prefetch = 0 : i64, scratch_operands = 0 : i64, tpu.core_type = #tpu.core_type<tc>, window_params = [{transform_indices = @transform_0, window_bounds = array<i64: 8, 256>}, {transform_indices = @transform_1, window_bounds = array<i64: 8, 256>}]} {
    %c0 = arith.constant 0 : index
    %c0_0 = arith.constant 0 : index
    %0 = vector.load %arg1[%c0, %c0_0] : memref<8x256xf32, #tpu.memory_space<vmem>>, vector<8x256xf32>
    %c0_1 = arith.constant 0 : index
    %c0_2 = arith.constant 0 : index
    %1 = vector.load %arg2[%c0_1, %c0_2] : memref<8x256xf32, #tpu.memory_space<vmem>>, vector<8x256xf32>
    tpu.vector_store %arg2[%c0_1, %c0_2], %0 {strides = array<i32>} : memref<8x256xf32, #tpu.memory_space<vmem>>, vector<8x256xf32>,
    return
  }
  func.func @transform_0(%arg0: i32) -> (i32, i32) {
    %c0_i32 = arith.constant 0 : i32
    %c0_i32_0 = arith.constant 0 : i32
    return %arg0, %c0_i32 : i32, i32
  }
  func.func @transform_1(%arg0: i32) -> (i32, i32) {
    %c0_i32 = arith.constant 0 : i32
    %c0_i32_0 = arith.constant 0 : i32
    return %arg0, %c0_i32 : i32, i32
  }
}

</mosaic_0001>

<llo_original>
// kernel: tpu_custom_call.1
$region0: #{tpu_custom_call.1}
  #allocation0 [shape = 'u32[]', space=smem, size = 0x4, offset = 0x4, fixed_abs, tag = 'smem constant byte address 0x4 - core index']
  #allocation1 [shape = 'u32[144,128]{1,0:T(1,128)}', space=vmem, size = 0x12000, scoped, tag = 'internal scratch']
  %s0 = inlined_call_operand.hbm [shape: f32[8,256], index: 0, kind: input, shape index: {}]
  %s1 = inlined_call_operand.hbm [shape: f32[8,256], index: 1, kind: output, shape index: {}]
  %s2 = sld [smem:[#allocation0]]
  $region18: #{tpu_custom_call.1} parent=0
    _
  %s4 = ssub.s32 1, %s2
  %s5 = scalar_select 0, %s4, %s2
  $region1: #{tpu_custom_call.1} parent=0
    #allocation2 [shape = 'u8[8192]{0}', space=vmem, size = 0x2000, scoped, tag = 'input window, operand 0, single buffered']
    #allocation3 [shape = 's32[1]{0}', space=sflag, size = 0x4, scoped, tag = 'scoped memory for tpu_custom_call.1']
    #allocation4 [shape = 's32[1]{0}', space=sflag, size = 0x4, scoped, tag = 'scoped memory for tpu_custom_call.1']
    #allocation5 [shape = 'u8[8192]{0}', space=vmem, size = 0x2000, scoped, tag = 'output window, operand 0, single buffered']
    %6 = vsyncpa [#allocation3], 0
    %7 = vsyncpa [#allocation4], 0
    // Predicated region
    $region2: #{tpu_custom_call.1} parent=1 // pred_check
      _
    $region3: #{tpu_custom_call.1} parent=1 // pred_check_branch
      %9 = sbr.rel (0) target = $region5
    $region4: #{tpu_custom_call.1} parent=1 // pred_region
      %s11 = ssub.s32 256, 256
      %12 = vsyncadd [#allocation3], %s11
      %s14 = sshll.u32 [#allocation2], 4
      %s15 = int_to_ptr.vmem [resolvable:$true] %s14
      %17 = dma.hbm_to_vmem [thread:$0]  %s0, 256, %s15, [#allocation3]
    $region5: #{tpu_custom_call.1} parent=1 // pred_fallthru
      _
    // Predicated region
    $region6: #{tpu_custom_call.1} parent=1 // pred_check
      _
    $region7: #{tpu_custom_call.1} parent=1 // pred_check_branch
      %19 = sbr.rel (0) target = $region9
    $region8: #{tpu_custom_call.1} parent=1 // pred_region
      %20 = dma.done [#allocation3], 256
    $region9: #{tpu_custom_call.1} parent=1 // pred_fallthru
      _
    %v21 = vld [vmem:[#allocation2] sm:$0xff]
    %v22 = vld [vmem:[#allocation2 + $0x8] sm:$0xff]
    %23 = vst [vmem:[#allocation5] sm:$0xff] %v21
    %24 = vst [vmem:[#allocation5 + $0x8] sm:$0xff] %v22
    // Predicated region
    $region10: #{tpu_custom_call.1} parent=1 // pred_check
      _
    $region11: #{tpu_custom_call.1} parent=1 // pred_check_branch
      %26 = sbr.rel (0) target = $region13
    $region12: #{tpu_custom_call.1} parent=1 // pred_region
      %s28 = ssub.s32 256, 256
      %29 = vsyncadd [#allocation4], %s28
      %s31 = sshll.u32 [#allocation5], 4
      %s32 = int_to_ptr.vmem [resolvable:$true] %s31
      %34 = dma.vmem_to_hbm [thread:$0]  %s32, 256, %s1, [#allocation4]
    $region13: #{tpu_custom_call.1} parent=1 // pred_fallthru
      _
    // Predicated region
    $region14: #{tpu_custom_call.1} parent=1 // pred_check
      _
    $region15: #{tpu_custom_call.1} parent=1 // pred_check_branch
      %36 = sbr.rel (0) target = $region17
    $region16: #{tpu_custom_call.1} parent=1 // pred_region
      %37 = dma.done [#allocation4], 256
    $region17: #{tpu_custom_call.1} parent=1 // pred_fallthru
      _
    %38 = vsyncpa [#allocation3], 1
    %39 = vsyncpa [#allocation4], 1

</llo_original>
